<compile_context>
chip_gen: v5e
topology: v5e:2x2
jax: 0.10.0
libtpu: 0.0.40
codegen_flags: <defaults>
</compile_context>

<pallas_src>
import functools

import jax
import jax.numpy as jnp
from jax.experimental import pallas as pl
from jax.experimental.pallas import tpu as pltpu


def channel_attention_kernel(x_ref, wt_ref, b_ref, o_ref, *, inv_hw):
    # x_ref: (TB, C, HW) block in the storage dtype.
    x = x_ref[...]
    # AdaptiveAvgPool2d(1): f32-accumulated sum over spatial dims, divide by HW.
    pool = jnp.sum(x, axis=-1, dtype=jnp.float32) * inv_hw                # (TB, C)
    # 1x1 conv over channels (weight pre-transposed host-side): f32 MXU matmul.
    fc = jnp.dot(pool, wt_ref[...],
                 preferred_element_type=jnp.float32) + b_ref[...]         # (TB, C)
    # LeakyReLU(negative_slope=0.1)
    act = jnp.where(fc > 0, fc, 0.1 * fc)                                 # (TB, C)
    # Channel-wise scale in the storage dtype (no full-block f32 up/down cast).
    o_ref[...] = x * act.astype(o_ref.dtype)[:, :, None]


def _vmem_capacity_bytes():
    try:
        return int(pltpu.get_tpu_info().vmem_capacity_bytes)
    except Exception:
        return 64 << 20  # conservative: v7x per-TensorCore VMEM


def _num_tensorcores():
    try:
        return max(1, int(getattr(jax.devices()[0], "num_cores", 1)))
    except Exception:
        return 1


def _choose_batch_tile(B, bytes_per_batch, block_budget_bytes, num_cores):
    """Largest batch tile whose block fits the per-buffer budget; shrink only as
    far as needed to give ~2 grid steps per TensorCore, and only when the
    shrunken tile stays reasonably large (>= 1 MiB) so per-step overhead
    doesn't dominate on single-TC v5e/v6e."""
    max_tb = max(1, min(B, block_budget_bytes // max(1, bytes_per_batch)))
    min_steps = 2 * max(1, num_cores)
    capped = max(1, B // min_steps)
    if B >= min_steps and capped * bytes_per_batch >= (1 << 20):
        max_tb = min(max_tb, capped)
    return max_tb


def channel_attention(x_nchw, weight, bias):
    """x_nchw: (B, C, H, W); weight: (C, C, 1, 1); bias: (C,)"""
    B, C, H, W = x_nchw.shape
    HW = H * W
    dtype = x_nchw.dtype
    itemsize = jnp.dtype(dtype).itemsize

    x = x_nchw.reshape(B, C, HW)

    # Pre-transpose weight on the host: kernel computes pool @ Wt.
    wt = jnp.asarray(weight, jnp.float32).reshape(C, C).T        # (C_in, C_out)
    b = jnp.asarray(bias, jnp.float32).reshape(1, C)

    # Generation-aware VMEM budgeting.
    vmem_cap = _vmem_capacity_bytes()
    vmem_limit = int(0.8 * vmem_cap)
    param_bytes = 2 * (C * C + C) * 4          # double-buffered weight + bias (f32)
    margin = 2 << 20
    # in block + out block, each double-buffered => 4 block copies.
    block_budget = max(1 << 20, (vmem_limit - param_bytes - margin) // 4)

    bytes_per_batch = C * HW * itemsize
    tb = _choose_batch_tile(B, bytes_per_batch, block_budget, _num_tensorcores())
    grid = (pl.cdiv(B, tb),)   # partial tail block (B % tb != 0) handled by masking

    vmem_need = 4 * tb * bytes_per_batch + param_bytes + margin
    # TODO(synk): if a single (1, C, HW) slab ever exceeds VMEM (very large C*HW),
    # add a spatial grid axis with a two-phase reduce-then-scale structure.
    vmem_limit_bytes = int(min(max(vmem_need, 32 << 20), int(0.9 * vmem_cap)))

    kernel = functools.partial(channel_attention_kernel, inv_hw=float(1.0 / HW))

    cost = pl.CostEstimate(
        flops=int(2 * B * C * HW + 2 * B * C * C),
        transcendentals=0,
        bytes_accessed=int(2 * B * C * HW * itemsize + (C * C + C) * 4),
    )

    out = pl.pallas_call(
        kernel,
        out_shape=jax.ShapeDtypeStruct((B, C, HW), dtype),
        grid_spec=pltpu.PrefetchScalarGridSpec(
            num_scalar_prefetch=0,
            grid=grid,
            in_specs=[
                pl.BlockSpec((tb, C, HW), lambda i: (i, 0, 0)),   # x: tb batches / step
                pl.BlockSpec((C, C), lambda i: (0, 0)),           # pre-transposed weight
                pl.BlockSpec((1, C), lambda i: (0, 0)),           # bias
            ],
            out_specs=pl.BlockSpec((tb, C, HW), lambda i: (i, 0, 0)),
        ),
        compiler_params=pltpu.CompilerParams(
            dimension_semantics=("parallel",),
            vmem_limit_bytes=vmem_limit_bytes,
        ),
        cost_estimate=cost,
    )(x, wt, b)

    return out.reshape(B, C, H, W)


def reference(x_nchw, weight, bias):
    # Pure-JAX reference mirroring the PyTorch forward.
    pool = jnp.mean(x_nchw.astype(jnp.float32), axis=(2, 3))          # (B, C)
    fc = pool @ weight.reshape(weight.shape[0], -1).astype(jnp.float32).T \
        + bias.astype(jnp.float32)
    act = jnp.where(fc > 0, fc, 0.1 * fc)
    return (x_nchw.astype(jnp.float32) * act[:, :, None, None]).astype(x_nchw.dtype)


if __name__ == "__main__":
    key = jax.random.PRNGKey(0)
    B, C, H, W = 2, 4, 16, 16      # NOTE: C < 8 wastes vreg sublanes; fine for the test shape.
    kx, kw, kb = jax.random.split(key, 3)
    x = jax.random.normal(kx, (B, C, H, W), dtype=jnp.float32)
    # Params match nn.Conv2d(C, C, 1, 1, 0, bias=True) shapes.
    weight = jax.random.normal(kw, (C, C, 1, 1), dtype=jnp.float32) * 0.1
    bias = jax.random.normal(kb, (C,), dtype=jnp.float32) * 0.1

    out = channel_attention(x, weight, bias)
    out = jax.block_until_ready(out)

    ref = reference(x, weight, bias)
    assert out.shape == (B, C, H, W)
    assert out.dtype == x.dtype
    assert jnp.allclose(out, ref, atol=1e-5, rtol=1e-5), "mismatch vs reference"
    print("KERNEL_OK")
</pallas_src>

<mosaic_0001>
module attributes {stable_mosaic.version = 11 : i64} {
  func.func @channel_attention_kernel(%arg0: i32, %arg1: memref<2x4x256xf32, #tpu.memory_space<vmem>>, %arg2: memref<4x4xf32, #tpu.memory_space<vmem>>, %arg3: memref<1x4xf32, #tpu.memory_space<vmem>>, %arg4: memref<2x4x256xf32, #tpu.memory_space<vmem>>) attributes {dimension_semantics = [#tpu.dimension_semantics<parallel>], iteration_bounds = array<i64: 1>, scalar_prefetch = 0 : i64, scratch_operands = 0 : i64, tpu.core_type = #tpu.core_type<tc>, window_params = [{transform_indices = @transform_0, window_bounds = array<i64: 2, 4, 256>}, {pipeline_mode = #tpu.pipeline_mode<synchronous>, transform_indices = @transform_1, window_bounds = array<i64: 4, 4>}, {pipeline_mode = #tpu.pipeline_mode<synchronous>, transform_indices = @transform_2, window_bounds = array<i64: 1, 4>}, {transform_indices = @transform_3, window_bounds = array<i64: 2, 4, 256>}]} {
    %c0 = arith.constant 0 : index
    %c0_0 = arith.constant 0 : index
    %c0_1 = arith.constant 0 : index
    %0 = vector.load %arg1[%c0, %c0_0, %c0_1] : memref<2x4x256xf32, #tpu.memory_space<vmem>>, vector<2x4x256xf32>
    %cst = arith.constant dense<0.000000e+00> : vector<2x4xf32>
    %1 = vector.multi_reduction <add>, %0, %cst [2] : vector<2x4x256xf32> to vector<2x4xf32>
    %cst_2 = arith.constant 3.906250e-03 : f32
    %2 = vector.broadcast %cst_2 : f32 to vector<2x4xf32>
    %3 = arith.mulf %1, %2 : vector<2x4xf32>
    %c0_3 = arith.constant 0 : index
    %c0_4 = arith.constant 0 : index
    %4 = vector.load %arg2[%c0_3, %c0_4] : memref<4x4xf32, #tpu.memory_space<vmem>>, vector<4x4xf32>
    %cst_5 = arith.constant dense<0.000000e+00> : vector<2x4xf32>
    %5 = tpu.matmul %3, %4, %cst_5 {dimension_numbers = #tpu.dot_dimension_numbers<[1], [0], [0], [1], [0, 0, 1, 1], [], []>} : vector<2x4xf32>, vector<4x4xf32>, vector<2x4xf32> -> vector<2x4xf32>
    %c0_6 = arith.constant 0 : index
    %c0_7 = arith.constant 0 : index
    %6 = vector.load %arg3[%c0_6, %c0_7] : memref<1x4xf32, #tpu.memory_space<vmem>>, vector<1x4xf32>
    %7 = vector.broadcast %6 : vector<1x4xf32> to vector<2x4xf32>
    %8 = arith.addf %5, %7 : vector<2x4xf32>
    %cst_8 = arith.constant 0.000000e+00 : f32
    %9 = vector.broadcast %cst_8 : f32 to vector<2x4xf32>
    %10 = arith.cmpf ogt, %8, %9 : vector<2x4xf32>
    %cst_9 = arith.constant 1.000000e-01 : f32
    %11 = vector.broadcast %cst_9 : f32 to vector<2x4xf32>
    %12 = arith.mulf %11, %8 : vector<2x4xf32>
    %13 = arith.select %10, %8, %12 : vector<2x4xi1>, vector<2x4xf32>
    %14 = vector.shape_cast %13 : vector<2x4xf32> to vector<2x4x1xf32>
    %15 = vector.broadcast %14 : vector<2x4x1xf32> to vector<2x4x256xf32>
    %16 = arith.mulf %0, %15 : vector<2x4x256xf32>
    %c0_10 = arith.constant 0 : index
    %c0_11 = arith.constant 0 : index
    %c0_12 = arith.constant 0 : index
    %17 = vector.load %arg4[%c0_10, %c0_11, %c0_12] : memref<2x4x256xf32, #tpu.memory_space<vmem>>, vector<2x4x256xf32>
    tpu.vector_store %arg4[%c0_10, %c0_11, %c0_12], %16 {strides = array<i32>} : memref<2x4x256xf32, #tpu.memory_space<vmem>>, vector<2x4x256xf32>,
    return
  }
  func.func @transform_0(%arg0: i32) -> (i32, i32, i32) {
    %c0_i32 = arith.constant 0 : i32
    %c0_i32_0 = arith.constant 0 : i32
    %c0_i32_1 = arith.constant 0 : i32
    return %arg0, %c0_i32, %c0_i32_0 : i32, i32, i32
  }
  func.func @transform_1(%arg0: i32) -> (i32, i32) {
    %c0_i32 = arith.constant 0 : i32
    %c0_i32_0 = arith.constant 0 : i32
    %c0_i32_1 = arith.constant 0 : i32
    return %c0_i32, %c0_i32_0 : i32, i32
  }
  func.func @transform_2(%arg0: i32) -> (i32, i32) {
    %c0_i32 = arith.constant 0 : i32
    %c0_i32_0 = arith.constant 0 : i32
    %c0_i32_1 = arith.constant 0 : i32
    return %c0_i32, %c0_i32_0 : i32, i32
  }
  func.func @transform_3(%arg0: i32) -> (i32, i32, i32) {
    %c0_i32 = arith.constant 0 : i32
    %c0_i32_0 = arith.constant 0 : i32
    %c0_i32_1 = arith.constant 0 : i32
    return %arg0, %c0_i32, %c0_i32_0 : i32, i32, i32
  }
}

</mosaic_0001>

<llo_original>
// kernel: tpu_custom_call.1
$region0: #{tpu_custom_call.1}
  #allocation0 [shape = 'u32[]', space=smem, size = 0x4, offset = 0x4, fixed_abs, tag = 'smem constant byte address 0x4 - core index']
  #allocation1 [shape = 'u32[72,128]{1,0:T(1,128)}', space=vmem, size = 0x9000, scoped, tag = 'internal scratch']
  %s0 = inlined_call_operand.hbm [shape: f32[2,4,256], index: 0, kind: input, shape index: {}]
  %s1 = inlined_call_operand.hbm [shape: f32[4,4], index: 1, kind: input, shape index: {}]
  %s2 = inlined_call_operand.vmem [shape: f32[1,4], index: 2, kind: input, shape index: {}]
  %s3 = inlined_call_operand.hbm [shape: f32[2,4,256], index: 3, kind: output, shape index: {}]
  %s4 = sld [smem:[#allocation0]]
  $region30: #{tpu_custom_call.1} parent=0
    _
  %s6 = ssub.s32 1, %s4
  %s7 = scalar_select 0, %s6, %s4
  $region1: #{tpu_custom_call.1} parent=0
    #allocation2 [shape = 'u8[8192]{0}', space=vmem, size = 0x2000, scoped, tag = 'input window, operand 0, single buffered']
    #allocation3 [shape = 's32[1]{0}', space=sflag, size = 0x4, scoped, tag = 'scoped memory for tpu_custom_call.1']
    #allocation4 [shape = 's32[1]{0}', space=sflag, size = 0x4, scoped, tag = 'scoped memory for tpu_custom_call.1']
    #allocation5 [shape = 'u8[2048]{0}', space=vmem, size = 0x800, scoped, tag = 'input window, operand 1, single buffered']
    #allocation6 [shape = 's32[1]{0}', space=sflag, size = 0x4, scoped, tag = 'scoped memory for tpu_custom_call.1']
    #allocation7 [shape = 'u8[8192]{0}', space=vmem, size = 0x2000, scoped, tag = 'output window, operand 0, single buffered']
    %8 = vsyncpa [#allocation3], 0
    %9 = vsyncpa [#allocation6], 0
    %10 = vsyncpa [#allocation4], 0
    // Predicated region
    $region2: #{tpu_custom_call.1} parent=1 // pred_check
      _
    $region3: #{tpu_custom_call.1} parent=1 // pred_check_branch
      %12 = sbr.rel (0) target = $region5
    $region4: #{tpu_custom_call.1} parent=1 // pred_region
      %14 = vsyncadd [#allocation3], 0
      %s15 = sshll.u32 %s0, 4
      %s16 = int_to_ptr.hbm [resolvable:$true] %s15
      %s17 = sshll.u32 [#allocation2], 4
      %s18 = int_to_ptr.vmem [resolvable:$true] %s17
      %23 = dma.hbm_to_vmem [thread:$0]  %s16, 256, %s18, [#allocation3], 128, 128, 8
    $region5: #{tpu_custom_call.1} parent=1 // pred_fallthru
      _
    // Predicated region
    $region6: #{tpu_custom_call.1} parent=1 // pred_check
      _
    $region7: #{tpu_custom_call.1} parent=1 // pred_check_branch
      %25 = sbr.rel (0) target = $region9
    $region8: #{tpu_custom_call.1} parent=1 // pred_region
      %27 = vsyncadd [#allocation6], 0
      %s29 = sshll.u32 %s1, 4
      %s30 = int_to_ptr.hbm [resolvable:$true] %s29
      %s31 = sshll.u32 [#allocation5], 4
      %s32 = int_to_ptr.vmem [resolvable:$true] %s31
      %34 = dma.hbm_to_vmem [thread:$0]  %s30, 64, %s32, [#allocation6]
    $region9: #{tpu_custom_call.1} parent=1 // pred_fallthru
      _
    // Predicated region
    $region10: #{tpu_custom_call.1} parent=1 // pred_check
      _
    $region11: #{tpu_custom_call.1} parent=1 // pred_check_branch
      %36 = sbr.rel (0) target = $region13
    $region12: #{tpu_custom_call.1} parent=1 // pred_region
      _
    $region13: #{tpu_custom_call.1} parent=1 // pred_fallthru
      _
    // Predicated region
    $region14: #{tpu_custom_call.1} parent=1 // pred_check
      _
    $region15: #{tpu_custom_call.1} parent=1 // pred_check_branch
      %38 = sbr.rel (0) target = $region17
    $region16: #{tpu_custom_call.1} parent=1 // pred_region
      %40 = dma.done [#allocation3], 256
    $region17: #{tpu_custom_call.1} parent=1 // pred_fallthru
      _
    // Predicated region
    $region18: #{tpu_custom_call.1} parent=1 // pred_check
      _
    $region19: #{tpu_custom_call.1} parent=1 // pred_check_branch
      %42 = sbr.rel (0) target = $region21
    $region20: #{tpu_custom_call.1} parent=1 // pred_region
      %44 = dma.done [#allocation6], 64
    $region21: #{tpu_custom_call.1} parent=1 // pred_fallthru
      _
    %v45 = vld [vmem:[#allocation2] sm:$0xff]
    %v46 = vld [vmem:[#allocation2 + $0x8] sm:$0xff]
    %49 = vst [vmem:[#allocation1] ss:$2 sm:$0xff] %v45
    %v50 = vld.sshfl [vmem:[#allocation1] sm:$0xff pattern:$0x75316420]
    %v51 = vld.sshfl [vmem:[#allocation1 + $0x8] sm:$0xff pattern:$0x75316420]
    %s52 = scalar_lea.vmem [#allocation1], 16
    %53 = vst [vmem:[%s52] ss:$2 sm:$0xff] %v46
    %v54 = vld.sshfl [vmem:[#allocation1 + $0x10] sm:$0xff pattern:$0x75316420]
    %v55 = vld.sshfl [vmem:[#allocation1 + $0x18] sm:$0xff pattern:$0x75316420]
    %vm60 = vcmask 1043456
    %v61 = vsel %vm60, %v50, 0.0
    %v62 = vsel %vm60, %v51, 0.0
    %v63 = vadd.f32 %v61, %v62
    %64 = vadd.xlane.f32.xlu0 %v63
    %v65 = vpop.xlane.xlu0 %64
    %v66 = vsel %vm60, %v54, 0.0
    %v67 = vsel %vm60, %v55, 0.0
    %v68 = vadd.f32 %v66, %v67
    %69 = vadd.xlane.f32.xlu0 %v68
    %v70 = vpop.xlane.xlu0 %69
    %v71 = vmul.f32 %v65, 0.00390625
    %v72 = vmul.f32 %v70, 0.00390625
    %v73 = vld [vmem:[#allocation5] sm:$0xf]
    %v74 = vld [vmem:[%s2] sm:$0x1]
    %v76 = vperm.slane %v74, 0
    %v80 = vlaneseq
    %v81 = vand.u32 %v80, 127
    %v82 = vperm.slane %v71, %v81
    %v83 = vperm.slane %v72, %v81
    %vm84 = vcmask 1041409
    %v85 = vsel %vm84, %v83, %v82
    %vm86 = vcmask 31744
    %v87 = vsel %vm86, %v85, 0
    %v90 = vsel %vm60, %v73, 0
    %92 = vmatpush.msra.mxu0 0.0
    %93 = vmatpush.msra.mxu0 0.0
    %94 = vmatpush.msra.mxu0 0.0
    %95 = vmatpush.msra.mxu0 0.0
    %96 = vmatpush.msra.mxu0 0.0
    %97 = vmatpush.msra.mxu0 0.0
    %98 = vmatpush.msra.mxu0 0.0
    %99 = vmatpush.msra.mxu0 0.0
    %100 = vmatpush.msra.mxu0 0.0
    %101 = vmatpush.msra.mxu0 0.0
    %102 = vmatpush.msra.mxu0 0.0
    %103 = vmatpush.msra.mxu0 0.0
    %104 = vmatpush.msra.mxu0 0.0
    %105 = vmatpush.msra.mxu0 0.0
    %106 = vmatpush.msra.mxu0 0.0
    %107 = vmatpush.msra.mxu0 %v90
    %108 = vmatmul.f32.gmra.mxu0 %v87
    %v109 = vpop.f32.mrf.mxu0
    %v110 = vadd.f32 %v76, %v109
    %111 = vdwg.mxu0
    %vm112 = vcmp.gt.f32.partialorder %v110, 0.0
    %v113 = vmul.f32 %v110, 0.1
    %v114 = vsel %vm112, %v110, %v113
    %v115 = vperm.slane %v114, 0
    %v116 = vlaneseq
    %v117 = vshrl.u32 %v116, 7
    %119 = vset.pattern.permute.xlu0 %v117
    %120 = vperm.xlu0 %119, %v115
    %v121 = vpop.permute.xlu0 %120
    %v122 = vperm.slane %v114, 1
    %v123 = vlaneseq
    %v124 = vshrl.u32 %v123, 7
    %126 = vset.pattern.permute.xlu0 %v124
    %127 = vperm.xlu0 %126, %v122
    %v128 = vpop.permute.xlu0 %127
    %v132 = vunpack.c.l.s4 839922192
    %v133 = vunpack.c.0.s8 %v132
    %v134 = vperm.slane %v121, %v133
    %v136 = vunpack.c.l.s4 839922192
    %v137 = vunpack.c.0.s8 %v136
    %v138 = vperm.slane %v128, %v137
    %v141 = vmul.f32 %v45, %v134
    %v142 = vmul.f32 %v46, %v138
    %143 = vst [vmem:[#allocation7] sm:$0xff] %v141
    %144 = vst [vmem:[#allocation7 + $0x8] sm:$0xff] %v142
    // Predicated region
    $region22: #{tpu_custom_call.1} parent=1 // pred_check
      _
    $region23: #{tpu_custom_call.1} parent=1 // pred_check_branch
      %146 = sbr.rel (0) target = $region25
    $region24: #{tpu_custom_call.1} parent=1 // pred_region
      %148 = vsyncadd [#allocation4], 0
      %s149 = sshll.u32 [#allocation7], 4
      %s150 = int_to_ptr.vmem [resolvable:$true] %s149
      %s151 = sshll.u32 %s3, 4
      %s152 = int_to_ptr.hbm [resolvable:$true] %s151
      %157 = dma.vmem_to_hbm [thread:$0]  %s150, 256, %s152, [#allocation4], 128, 128, 8
    $region25: #{tpu_custom_call.1} parent=1 // pred_fallthru
      _
    // Predicated region
    $region26: #{tpu_custom_call.1} parent=1 // pred_check
      _
    $region27: #{tpu_custom_call.1} parent=1 // pred_check_branch
      %159 = sbr.rel (0) target = $region29
    $region28: #{tpu_custom_call.1} parent=1 // pred_region
      %161 = dma.done [#allocation4], 256
    $region29: #{tpu_custom_call.1} parent=1 // pred_fallthru
      _
    %162 = vsyncpa [#allocation3], 1
    %163 = vsyncpa [#allocation6], 1
    %164 = vsyncpa [#allocation4], 1

</llo_original>
